<compile_context>
chip_gen: v5e
topology: v5e:2x2
jax: 0.10.0
libtpu: 0.0.40
codegen_flags: <defaults>
</compile_context>

<pallas_src>
import functools

import jax
import jax.numpy as jnp
from jax.experimental import pallas as pl
from jax.experimental.pallas import tpu as pltpu

_LANES = 128


def _round_up(n, m):
    return ((n + m - 1) // m) * m


def _fused_ensemble_kernel(x_ref, w_ref, b_ref, m_ref,
                           probs_ref, alphas_ref, precs_ref):
    # x_ref:      [TB, D]        (bf16)
    # w_ref:      [D, EKp]       (bf16)   packed member weights, lane-padded
    # b_ref:      [1, EKp]       (f32)    packed biases (0 in padded lanes)
    # m_ref:      [EKp, EKp]     (f32)    block-diagonal segment-sum matrix
    # probs_ref:  [TB, EKp]      (f32)
    # alphas_ref: [TB, EKp]      (f32)
    # precs_ref:  [TB, EKp]      (f32)    per-member precision, broadcast
    logits = jnp.dot(x_ref[...], w_ref[...],
                     preferred_element_type=jnp.float32) + b_ref[...]
    # NOTE: no max-subtraction / clamping -- matches the PyTorch reference
    # semantics (exp of raw logits).
    alpha = jnp.exp(logits)

    # Per-member Dirichlet precision via a segment-sum matmul: M is ones on
    # each member's KxK diagonal block (identity on padded lanes, so padded
    # precision is exactly 1).  Exact f32 accumulate on the otherwise-idle MXU.
    prec = jnp.dot(alpha, m_ref[...], preferred_element_type=jnp.float32)

    # EUP reciprocal + one Newton step (restores ~f32 accuracy at VPU cost of
    # two cheap elementwise ops).
    inv = pl.reciprocal(prec, approx=True)
    inv = inv * (2.0 - prec * inv)

    probs_ref[...] = alpha * inv
    alphas_ref[...] = alpha
    precs_ref[...] = prec


def pack_prior_ensemble_params(weights, biases, *, compute_dtype=jnp.bfloat16):
    """Pre-pack parameters ONCE (out of the per-call path).

    weights: [E, D, K], biases: [E, 1, K].
    Returns (w_packed [D, EKp] bf16, b_packed [1, EKp] f32,
             seg_matrix [EKp, EKp] f32) with EKp = round_up(E*K, 128).
    """
    E, D, K = weights.shape
    EK = E * K
    EKp = _round_up(EK, _LANES)

    w_packed = jnp.transpose(weights, (1, 0, 2)).reshape(D, EK)
    w_packed = jnp.pad(w_packed, ((0, 0), (0, EKp - EK))).astype(compute_dtype)
    b_packed = jnp.pad(biases.reshape(1, EK).astype(jnp.float32),
                       ((0, 0), (0, EKp - EK)))

    # Segment ids: member index for valid lanes, a unique singleton segment per
    # padded lane (so padded precision = padded alpha = exp(0) = 1, no /0).
    col = jnp.arange(EKp)
    seg = jnp.where(col < EK, col // K, E + (col - EK))
    seg_matrix = (seg[:, None] == seg[None, :]).astype(jnp.float32)
    return w_packed, b_packed, seg_matrix


def prior_ensemble_forward(x_nchw, w_packed, b_packed, seg_matrix, *,
                           num_members, num_classes,
                           compute_dtype=jnp.bfloat16, max_batch_tile=512):
    """x_nchw: [B, C, H, W]; packed params from pack_prior_ensemble_params.

    Returns (probs, alphas, precs) with shapes [E,B,K], [E,B,K], [E,B,1],
    matching torch.stack over the ensemble members.
    """
    E, K = num_members, num_classes
    EK = E * K
    D, EKp = w_packed.shape
    B = x_nchw.shape[0]

    x_flat = x_nchw.reshape(B, -1).astype(compute_dtype)
    assert x_flat.shape[1] == D, (x_flat.shape, D)

    # Batch tiling: single tile at small B; 512-row tiles (padded) otherwise.
    if B <= max_batch_tile:
        tile_b, b_pad = B, B
    else:
        tile_b = max_batch_tile
        b_pad = _round_up(B, tile_b)
        x_flat = jnp.pad(x_flat, ((0, b_pad - B), (0, 0)))
    grid_b = b_pad // tile_b

    itemsize = jnp.dtype(compute_dtype).itemsize
    # Actual VMEM footprint (double-buffered x tile + outputs, resident params).
    vmem_bytes = (2 * tile_b * D * itemsize
                  + D * EKp * itemsize
                  + EKp * 4 + EKp * EKp * 4
                  + 2 * 3 * tile_b * EKp * 4)
    vmem_limit = int(min(64 << 20, max(2 << 20, 2 * vmem_bytes)))

    cost = pl.CostEstimate(
        flops=2 * b_pad * D * EKp + 2 * b_pad * EKp * EKp,
        transcendentals=2 * b_pad * EKp,           # exp + approx reciprocal
        bytes_accessed=(b_pad * D * itemsize + D * EKp * itemsize
                        + EKp * 4 + EKp * EKp * 4 + 3 * b_pad * EKp * 4),
    )

    out_shapes = (
        jax.ShapeDtypeStruct((b_pad, EKp), jnp.float32),   # packed probs
        jax.ShapeDtypeStruct((b_pad, EKp), jnp.float32),   # packed alphas
        jax.ShapeDtypeStruct((b_pad, EKp), jnp.float32),   # packed precisions
    )

    probs_flat, alphas_flat, precs_flat = pl.pallas_call(
        _fused_ensemble_kernel,
        out_shape=out_shapes,
        grid_spec=pltpu.PrefetchScalarGridSpec(
            num_scalar_prefetch=0,
            grid=(grid_b,),
            in_specs=[
                pl.BlockSpec((tile_b, D), lambda i: (i, 0)),     # x tile
                pl.BlockSpec((D, EKp), lambda i: (0, 0)),        # weights (resident)
                pl.BlockSpec((1, EKp), lambda i: (0, 0)),        # biases
                pl.BlockSpec((EKp, EKp), lambda i: (0, 0)),      # segment matrix
            ],
            out_specs=[
                pl.BlockSpec((tile_b, EKp), lambda i: (i, 0)),
                pl.BlockSpec((tile_b, EKp), lambda i: (i, 0)),
                pl.BlockSpec((tile_b, EKp), lambda i: (i, 0)),
            ],
        ),
        compiler_params=pltpu.CompilerParams(
            dimension_semantics=("parallel",),
            vmem_limit_bytes=vmem_limit,
        ),
        cost_estimate=cost,
    )(x_flat, w_packed, b_packed, seg_matrix)

    # Cheap XLA layout plumbing back to the torch.stack layout; padded batch
    # rows and padded lanes are sliced off.
    probs = probs_flat[:B, :EK].reshape(B, E, K).transpose(1, 0, 2)
    alphas = alphas_flat[:B, :EK].reshape(B, E, K).transpose(1, 0, 2)
    precs = precs_flat[:B, :EK].reshape(B, E, K)[:, :, :1].transpose(1, 0, 2)
    return probs, alphas, precs


if __name__ == "__main__":
    key = jax.random.PRNGKey(0)
    k_x, k_w, k_b = jax.random.split(key, 3)

    # Small, module-consistent shapes.
    # TODO(synk): PriorEnsemble wraps arbitrary sub-nets; here each member is
    # modeled as the standard linear Dirichlet prior-network head.
    E = 3            # ensemble members
    B, C, H, W = 2, 4, 16, 16
    D = C * H * W    # flattened feature dim = 1024
    K = 16           # number of classes (Dirichlet concentration dims)

    x = jax.random.normal(k_x, (B, C, H, W), dtype=jnp.float32)
    weights = 0.02 * jax.random.normal(k_w, (E, D, K), dtype=jnp.float32)
    biases = 0.1 * jax.random.normal(k_b, (E, 1, K), dtype=jnp.float32)

    # Parameters packed once, outside the per-call path.
    w_packed, b_packed, seg_matrix = pack_prior_ensemble_params(weights, biases)

    fwd = jax.jit(functools.partial(prior_ensemble_forward,
                                    num_members=E, num_classes=K))
    probs, alphas, precs = fwd(x, w_packed, b_packed, seg_matrix)
    jax.block_until_ready((probs, alphas, precs))

    # Reference in plain JAX, mirroring the bf16-input / f32-accumulate matmul.
    x_flat_ref = x.reshape(B, D).astype(jnp.bfloat16).astype(jnp.float32)
    w_ref = weights.astype(jnp.bfloat16).astype(jnp.float32)
    logits_ref = jnp.einsum("bd,edk->ebk", x_flat_ref, w_ref) + biases
    alphas_ref = jnp.exp(logits_ref)
    precs_ref = jnp.sum(alphas_ref, axis=-1, keepdims=True)
    probs_ref = alphas_ref / precs_ref

    assert probs.shape == (E, B, K) and alphas.shape == (E, B, K) and precs.shape == (E, B, 1)
    assert jnp.allclose(probs, probs_ref, atol=1e-5, rtol=1e-5)
    assert jnp.allclose(alphas, alphas_ref, atol=1e-4, rtol=1e-5)
    assert jnp.allclose(precs, precs_ref, atol=1e-3, rtol=1e-5)

    print("KERNEL_OK")
</pallas_src>

<mosaic_0001>
module attributes {stable_mosaic.version = 11 : i64} {
  func.func @_fused_ensemble_kernel(%arg0: i32, %arg1: memref<2x1024xbf16, #tpu.memory_space<vmem>>, %arg2: memref<1024x128xbf16, #tpu.memory_space<vmem>>, %arg3: memref<1x128xf32, #tpu.memory_space<vmem>>, %arg4: memref<128x128xf32, #tpu.memory_space<vmem>>, %arg5: memref<2x128xf32, #tpu.memory_space<vmem>>, %arg6: memref<2x128xf32, #tpu.memory_space<vmem>>, %arg7: memref<2x128xf32, #tpu.memory_space<vmem>>) attributes {dimension_semantics = [#tpu.dimension_semantics<parallel>], iteration_bounds = array<i64: 1>, scalar_prefetch = 0 : i64, scratch_operands = 0 : i64, tpu.core_type = #tpu.core_type<tc>, window_params = [{transform_indices = @transform_0, window_bounds = array<i64: 2, 1024>}, {pipeline_mode = #tpu.pipeline_mode<synchronous>, transform_indices = @transform_1, window_bounds = array<i64: 1024, 128>}, {pipeline_mode = #tpu.pipeline_mode<synchronous>, transform_indices = @transform_2, window_bounds = array<i64: 1, 128>}, {pipeline_mode = #tpu.pipeline_mode<synchronous>, transform_indices = @transform_3, window_bounds = array<i64: 128, 128>}, {transform_indices = @transform_4, window_bounds = array<i64: 2, 128>}, {transform_indices = @transform_5, window_bounds = array<i64: 2, 128>}, {transform_indices = @transform_6, window_bounds = array<i64: 2, 128>}]} {
    %c0 = arith.constant 0 : index
    %c0_0 = arith.constant 0 : index
    %0 = vector.load %arg1[%c0, %c0_0] : memref<2x1024xbf16, #tpu.memory_space<vmem>>, vector<2x1024xbf16>
    %c0_1 = arith.constant 0 : index
    %c0_2 = arith.constant 0 : index
    %1 = vector.load %arg2[%c0_1, %c0_2] : memref<1024x128xbf16, #tpu.memory_space<vmem>>, vector<1024x128xbf16>
    %cst = arith.constant dense<0.000000e+00> : vector<2x128xf32>
    %2 = tpu.matmul %0, %1, %cst {dimension_numbers = #tpu.dot_dimension_numbers<[1], [0], [0], [1], [0, 0, 1, 1], [], []>} : vector<2x1024xbf16>, vector<1024x128xbf16>, vector<2x128xf32> -> vector<2x128xf32>
    %c0_3 = arith.constant 0 : index
    %c0_4 = arith.constant 0 : index
    %3 = vector.load %arg3[%c0_3, %c0_4] : memref<1x128xf32, #tpu.memory_space<vmem>>, vector<1x128xf32>
    %4 = vector.broadcast %3 : vector<1x128xf32> to vector<2x128xf32>
    %5 = arith.addf %2, %4 : vector<2x128xf32>
    %6 = math.exp %5 : vector<2x128xf32>
    %c0_5 = arith.constant 0 : index
    %c0_6 = arith.constant 0 : index
    %7 = vector.load %arg4[%c0_5, %c0_6] : memref<128x128xf32, #tpu.memory_space<vmem>>, vector<128x128xf32>
    %cst_7 = arith.constant dense<0.000000e+00> : vector<2x128xf32>
    %8 = tpu.matmul %6, %7, %cst_7 {dimension_numbers = #tpu.dot_dimension_numbers<[1], [0], [0], [1], [0, 0, 1, 1], [], []>} : vector<2x128xf32>, vector<128x128xf32>, vector<2x128xf32> -> vector<2x128xf32>
    %9 = tpu.reciprocal %8 {approx = true} : vector<2x128xf32> -> vector<2x128xf32>
    %10 = arith.mulf %8, %9 : vector<2x128xf32>
    %cst_8 = arith.constant 2.000000e+00 : f32
    %11 = vector.broadcast %cst_8 : f32 to vector<2x128xf32>
    %12 = arith.subf %11, %10 : vector<2x128xf32>
    %13 = arith.mulf %9, %12 : vector<2x128xf32>
    %14 = arith.mulf %6, %13 : vector<2x128xf32>
    %c0_9 = arith.constant 0 : index
    %c0_10 = arith.constant 0 : index
    %15 = vector.load %arg5[%c0_9, %c0_10] : memref<2x128xf32, #tpu.memory_space<vmem>>, vector<2x128xf32>
    tpu.vector_store %arg5[%c0_9, %c0_10], %14 {strides = array<i32>} : memref<2x128xf32, #tpu.memory_space<vmem>>, vector<2x128xf32>,
    %c0_11 = arith.constant 0 : index
    %c0_12 = arith.constant 0 : index
    %16 = vector.load %arg6[%c0_11, %c0_12] : memref<2x128xf32, #tpu.memory_space<vmem>>, vector<2x128xf32>
    tpu.vector_store %arg6[%c0_11, %c0_12], %6 {strides = array<i32>} : memref<2x128xf32, #tpu.memory_space<vmem>>, vector<2x128xf32>,
    %c0_13 = arith.constant 0 : index
    %c0_14 = arith.constant 0 : index
    %17 = vector.load %arg7[%c0_13, %c0_14] : memref<2x128xf32, #tpu.memory_space<vmem>>, vector<2x128xf32>
    tpu.vector_store %arg7[%c0_13, %c0_14], %8 {strides = array<i32>} : memref<2x128xf32, #tpu.memory_space<vmem>>, vector<2x128xf32>,
    return
  }
  func.func @transform_0(%arg0: i32) -> (i32, i32) {
    %c0_i32 = arith.constant 0 : i32
    %c0_i32_0 = arith.constant 0 : i32
    return %arg0, %c0_i32 : i32, i32
  }
  func.func @transform_1(%arg0: i32) -> (i32, i32) {
    %c0_i32 = arith.constant 0 : i32
    %c0_i32_0 = arith.constant 0 : i32
    %c0_i32_1 = arith.constant 0 : i32
    return %c0_i32, %c0_i32_0 : i32, i32
  }
  func.func @transform_2(%arg0: i32) -> (i32, i32) {
    %c0_i32 = arith.constant 0 : i32
    %c0_i32_0 = arith.constant 0 : i32
    %c0_i32_1 = arith.constant 0 : i32
    return %c0_i32, %c0_i32_0 : i32, i32
  }
  func.func @transform_3(%arg0: i32) -> (i32, i32) {
    %c0_i32 = arith.constant 0 : i32
    %c0_i32_0 = arith.constant 0 : i32
    %c0_i32_1 = arith.constant 0 : i32
    return %c0_i32, %c0_i32_0 : i32, i32
  }
  func.func @transform_4(%arg0: i32) -> (i32, i32) {
    %c0_i32 = arith.constant 0 : i32
    %c0_i32_0 = arith.constant 0 : i32
    return %arg0, %c0_i32 : i32, i32
  }
  func.func @transform_5(%arg0: i32) -> (i32, i32) {
    %c0_i32 = arith.constant 0 : i32
    %c0_i32_0 = arith.constant 0 : i32
    return %arg0, %c0_i32 : i32, i32
  }
  func.func @transform_6(%arg0: i32) -> (i32, i32) {
    %c0_i32 = arith.constant 0 : i32
    %c0_i32_0 = arith.constant 0 : i32
    return %arg0, %c0_i32 : i32, i32
  }
}

</mosaic_0001>

<llo_original>
// kernel: prior_ensemble_forward.1
$region0: #{prior_ensemble_forward.1}
  #allocation0 [shape = 'u32[]', space=smem, size = 0x4, offset = 0x4, fixed_abs, tag = 'smem constant byte address 0x4 - core index']
  #allocation1 [shape = 'u32[72,128]{1,0:T(1,128)}', space=vmem, size = 0x9000, scoped, tag = 'internal scratch']
  %s0 = inlined_call_operand.vmem [shape: bf16[2,1024], index: 0, kind: input, shape index: {}]
  %s1 = inlined_call_operand.hbm [shape: bf16[1024,128], index: 1, kind: input, shape index: {}]
  %s2 = inlined_call_operand.vmem [shape: f32[1,128], index: 2, kind: input, shape index: {}]
  %s3 = inlined_call_operand.vmem [shape: f32[128,128], index: 3, kind: input, shape index: {}]
  %s4 = inlined_call_operand.vmem [shape: f32[2,128], index: 4, kind: output, shape index: {0}]
  %s5 = inlined_call_operand.vmem [shape: f32[2,128], index: 5, kind: output, shape index: {1}]
  %s6 = inlined_call_operand.vmem [shape: f32[2,128], index: 6, kind: output, shape index: {2}]
  %7 = xla_tuple %s4, %s5, %s6
  %s8 = sld [smem:[#allocation0]]
  $region46: #{prior_ensemble_forward.1} parent=0
    _
  %s10 = ssub.s32 1, %s8
  %s11 = scalar_select 0, %s10, %s8
  $region1: #{prior_ensemble_forward.1} parent=0
    #allocation2 [shape = 'u8[262144]{0}', space=vmem, size = 0x40000, scoped, tag = 'input window, operand 1, single buffered']
    #allocation3 [shape = 's32[1]{0}', space=sflag, size = 0x4, scoped, tag = 'scoped memory for prior_ensemble_forward.1']
    %12 = vsyncpa [#allocation3], 0
    // Predicated region
    $region2: #{prior_ensemble_forward.1} parent=1 // pred_check
      _
    $region3: #{prior_ensemble_forward.1} parent=1 // pred_check_branch
      %14 = sbr.rel (0) target = $region5
    $region4: #{prior_ensemble_forward.1} parent=1 // pred_region
      _
    $region5: #{prior_ensemble_forward.1} parent=1 // pred_fallthru
      _
    // Predicated region
    $region6: #{prior_ensemble_forward.1} parent=1 // pred_check
      _
    $region7: #{prior_ensemble_forward.1} parent=1 // pred_check_branch
      %16 = sbr.rel (0) target = $region9
    $region8: #{prior_ensemble_forward.1} parent=1 // pred_region
      %18 = vsyncadd [#allocation3], 0
      %s19 = sshll.u32 %s1, 4
      %s20 = int_to_ptr.hbm [resolvable:$true] %s19
      %s21 = sshll.u32 [#allocation2], 4
      %s22 = int_to_ptr.vmem [resolvable:$true] %s21
      %27 = dma.hbm_to_vmem [thread:$0]  %s20, 8192, %s22, [#allocation3], 64, 64, 4
    $region9: #{prior_ensemble_forward.1} parent=1 // pred_fallthru
      _
    // Predicated region
    $region10: #{prior_ensemble_forward.1} parent=1 // pred_check
      _
    $region11: #{prior_ensemble_forward.1} parent=1 // pred_check_branch
      %29 = sbr.rel (0) target = $region13
    $region12: #{prior_ensemble_forward.1} parent=1 // pred_region
      _
    $region13: #{prior_ensemble_forward.1} parent=1 // pred_fallthru
      _
    // Predicated region
    $region14: #{prior_ensemble_forward.1} parent=1 // pred_check
      _
    $region15: #{prior_ensemble_forward.1} parent=1 // pred_check_branch
      %31 = sbr.rel (0) target = $region17
    $region16: #{prior_ensemble_forward.1} parent=1 // pred_region
      _
    $region17: #{prior_ensemble_forward.1} parent=1 // pred_fallthru
      _
    // Predicated region
    $region18: #{prior_ensemble_forward.1} parent=1 // pred_check
      _
    $region19: #{prior_ensemble_forward.1} parent=1 // pred_check_branch
      %33 = sbr.rel (0) target = $region21
    $region20: #{prior_ensemble_forward.1} parent=1 // pred_region
      %35 = dma.done [#allocation3], 8192
    $region21: #{prior_ensemble_forward.1} parent=1 // pred_fallthru
      _
    %v36 = vld [vmem:[%s0] sm:$0xff]
    %v37 = vld [vmem:[#allocation2] sm:$0xf]
    %v38 = vld [vmem:[#allocation2 + $0x4] sm:$0xf]
    %v39 = vld [vmem:[#allocation2 + $0x8] sm:$0xf]
    %v40 = vld [vmem:[#allocation2 + $0xc] sm:$0xf]
    %v41 = vld [vmem:[#allocation2 + $0x10] sm:$0xf]
    %v42 = vld [vmem:[#allocation2 + $0x14] sm:$0xf]
    %v43 = vld [vmem:[#allocation2 + $0x18] sm:$0xf]
    %v44 = vld [vmem:[#allocation2 + $0x1c] sm:$0xf]
    %v45 = vld [vmem:[#allocation2 + $0x20] sm:$0xf]
    %v46 = vld [vmem:[#allocation2 + $0x24] sm:$0xf]
    %v47 = vld [vmem:[#allocation2 + $0x28] sm:$0xf]
    %v48 = vld [vmem:[#allocation2 + $0x2c] sm:$0xf]
    %v49 = vld [vmem:[#allocation2 + $0x30] sm:$0xf]
    %v50 = vld [vmem:[#allocation2 + $0x34] sm:$0xf]
    %v51 = vld [vmem:[#allocation2 + $0x38] sm:$0xf]
    %v52 = vld [vmem:[#allocation2 + $0x3c] sm:$0xf]
    %v53 = vld [vmem:[#allocation2 + $0x40] sm:$0xf]
    %v54 = vld [vmem:[#allocation2 + $0x44] sm:$0xf]
    %v55 = vld [vmem:[#allocation2 + $0x48] sm:$0xf]
    %v56 = vld [vmem:[#allocation2 + $0x4c] sm:$0xf]
    %v57 = vld [vmem:[#allocation2 + $0x50] sm:$0xf]
    %v58 = vld [vmem:[#allocation2 + $0x54] sm:$0xf]
    %v59 = vld [vmem:[#allocation2 + $0x58] sm:$0xf]
    %v60 = vld [vmem:[#allocation2 + $0x5c] sm:$0xf]
    %v61 = vld [vmem:[#allocation2 + $0x60] sm:$0xf]
    %v62 = vld [vmem:[#allocation2 + $0x64] sm:$0xf]
    %v63 = vld [vmem:[#allocation2 + $0x68] sm:$0xf]
    %v64 = vld [vmem:[#allocation2 + $0x6c] sm:$0xf]
    %v65 = vld [vmem:[#allocation2 + $0x70] sm:$0xf]
    %v66 = vld [vmem:[#allocation2 + $0x74] sm:$0xf]
    %v67 = vld [vmem:[#allocation2 + $0x78] sm:$0xf]
    %v68 = vld [vmem:[#allocation2 + $0x7c] sm:$0xf]
    %v69 = vld [vmem:[#allocation2 + $0x80] sm:$0xf]
    %v70 = vld [vmem:[#allocation2 + $0x84] sm:$0xf]
    %v71 = vld [vmem:[#allocation2 + $0x88] sm:$0xf]
    %v72 = vld [vmem:[#allocation2 + $0x8c] sm:$0xf]
    %v73 = vld [vmem:[#allocation2 + $0x90] sm:$0xf]
    %v74 = vld [vmem:[#allocation2 + $0x94] sm:$0xf]
    %v75 = vld [vmem:[#allocation2 + $0x98] sm:$0xf]
    %v76 = vld [vmem:[#allocation2 + $0x9c] sm:$0xf]
    %v77 = vld [vmem:[#allocation2 + $0xa0] sm:$0xf]
    %v78 = vld [vmem:[#allocation2 + $0xa4] sm:$0xf]
    %v79 = vld [vmem:[#allocation2 + $0xa8] sm:$0xf]
    %v80 = vld [vmem:[#allocation2 + $0xac] sm:$0xf]
    %v81 = vld [vmem:[#allocation2 + $0xb0] sm:$0xf]
    %v82 = vld [vmem:[#allocation2 + $0xb4] sm:$0xf]
    %v83 = vld [vmem:[#allocation2 + $0xb8] sm:$0xf]
    %v84 = vld [vmem:[#allocation2 + $0xbc] sm:$0xf]
    %v85 = vld [vmem:[#allocation2 + $0xc0] sm:$0xf]
    %v86 = vld [vmem:[#allocation2 + $0xc4] sm:$0xf]
    %v87 = vld [vmem:[#allocation2 + $0xc8] sm:$0xf]
    %v88 = vld [vmem:[#allocation2 + $0xcc] sm:$0xf]
    %v89 = vld [vmem:[#allocation2 + $0xd0] sm:$0xf]
    %v90 = vld [vmem:[#allocation2 + $0xd4] sm:$0xf]
    %v91 = vld [vmem:[#allocation2 + $0xd8] sm:$0xf]
    %v92 = vld [vmem:[#allocation2 + $0xdc] sm:$0xf]
    %v93 = vld [vmem:[#allocation2 + $0xe0] sm:$0xf]
    %v94 = vld [vmem:[#allocation2 + $0xe4] sm:$0xf]
    %v95 = vld [vmem:[#allocation2 + $0xe8] sm:$0xf]
    %v96 = vld [vmem:[#allocation2 + $0xec] sm:$0xf]
    %v97 = vld [vmem:[#allocation2 + $0xf0] sm:$0xf]
    %v98 = vld [vmem:[#allocation2 + $0xf4] sm:$0xf]
    %v99 = vld [vmem:[#allocation2 + $0xf8] sm:$0xf]
    %v100 = vld [vmem:[#allocation2 + $0xfc] sm:$0xf]
    %v101 = vld [vmem:[#allocation2 + $0x100] sm:$0xf]
    %v102 = vld [vmem:[#allocation2 + $0x104] sm:$0xf]
    %v103 = vld [vmem:[#allocation2 + $0x108] sm:$0xf]
    %v104 = vld [vmem:[#allocation2 + $0x10c] sm:$0xf]
    %v105 = vld [vmem:[#allocation2 + $0x110] sm:$0xf]
    %v106 = vld [vmem:[#allocation2 + $0x114] sm:$0xf]
    %v107 = vld [vmem:[#allocation2 + $0x118] sm:$0xf]
    %v108 = vld [vmem:[#allocation2 + $0x11c] sm:$0xf]
    %v109 = vld [vmem:[#allocation2 + $0x120] sm:$0xf]
    %v110 = vld [vmem:[#allocation2 + $0x124] sm:$0xf]
    %v111 = vld [vmem:[#allocation2 + $0x128] sm:$0xf]
    %v112 = vld [vmem:[#allocation2 + $0x12c] sm:$0xf]
    %v113 = vld [vmem:[#allocation2 + $0x130] sm:$0xf]
    %v114 = vld [vmem:[#allocation2 + $0x134] sm:$0xf]
    %v115 = vld [vmem:[#allocation2 + $0x138] sm:$0xf]
    %v116 = vld [vmem:[#allocation2 + $0x13c] sm:$0xf]
    %v117 = vld [vmem:[#allocation2 + $0x140] sm:$0xf]
    %v118 = vld [vmem:[#allocation2 + $0x144] sm:$0xf]
    %v119 = vld [vmem:[#allocation2 + $0x148] sm:$0xf]
    %v120 = vld [vmem:[#allocation2 + $0x14c] sm:$0xf]
    %v121 = vld [vmem:[#allocation2 + $0x150] sm:$0xf]
    %v122 = vld [vmem:[#allocation2 + $0x154] sm:$0xf]
    %v123 = vld [vmem:[#allocation2 + $0x158] sm:$0xf]
    %v124 = vld [vmem:[#allocation2 + $0x15c] sm:$0xf]
    %v125 = vld [vmem:[#allocation2 + $0x160] sm:$0xf]
    %v126 = vld [vmem:[#allocation2 + $0x164] sm:$0xf]
    %v127 = vld [vmem:[#allocation2 + $0x168] sm:$0xf]
    %v128 = vld [vmem:[#allocation2 + $0x16c] sm:$0xf]
    %v129 = vld [vmem:[#allocation2 + $0x170] sm:$0xf]
    %v130 = vld [vmem:[#allocation2 + $0x174] sm:$0xf]
    %v131 = vld [vmem:[#allocation2 + $0x178] sm:$0xf]
    %v132 = vld [vmem:[#allocation2 + $0x17c] sm:$0xf]
    %v133 = vld [vmem:[#allocation2 + $0x180] sm:$0xf]
    %v134 = vld [vmem:[#allocation2 + $0x184] sm:$0xf]
    %v135 = vld [vmem:[#allocation2 + $0x188] sm:$0xf]
    %v136 = vld [vmem:[#allocation2 + $0x18c] sm:$0xf]
    %v137 = vld [vmem:[#allocation2 + $0x190] sm:$0xf]
    %v138 = vld [vmem:[#allocation2 + $0x194] sm:$0xf]
    %v139 = vld [vmem:[#allocation2 + $0x198] sm:$0xf]
    %v140 = vld [vmem:[#allocation2 + $0x19c] sm:$0xf]
    %v141 = vld [vmem:[#allocation2 + $0x1a0] sm:$0xf]
    %v142 = vld [vmem:[#allocation2 + $0x1a4] sm:$0xf]
    %v143 = vld [vmem:[#allocation2 + $0x1a8] sm:$0xf]
    %v144 = vld [vmem:[#allocation2 + $0x1ac] sm:$0xf]
    %v145 = vld [vmem:[#allocation2 + $0x1b0] sm:$0xf]
    %v146 = vld [vmem:[#allocation2 + $0x1b4] sm:$0xf]
    %v147 = vld [vmem:[#allocation2 + $0x1b8] sm:$0xf]
    %v148 = vld [vmem:[#allocation2 + $0x1bc] sm:$0xf]
    %v149 = vld [vmem:[#allocation2 + $0x1c0] sm:$0xf]
    %v150 = vld [vmem:[#allocation2 + $0x1c4] sm:$0xf]
    %v151 = vld [vmem:[#allocation2 + $0x1c8] sm:$0xf]
    %v152 = vld [vmem:[#allocation2 + $0x1cc] sm:$0xf]
    %v153 = vld [vmem:[#allocation2 + $0x1d0] sm:$0xf]
    %v154 = vld [vmem:[#allocation2 + $0x1d4] sm:$0xf]
    %v155 = vld [vmem:[#allocation2 + $0x1d8] sm:$0xf]
    %v156 = vld [vmem:[#allocation2 + $0x1dc] sm:$0xf]
    %v157 = vld [vmem:[#allocation2 + $0x1e0] sm:$0xf]
    %v158 = vld [vmem:[#allocation2 + $0x1e4] sm:$0xf]
    %v159 = vld [vmem:[#allocation2 + $0x1e8] sm:$0xf]
    %v160 = vld [vmem:[#allocation2 + $0x1ec] sm:$0xf]
    %v161 = vld [vmem:[#allocation2 + $0x1f0] sm:$0xf]
    %v162 = vld [vmem:[#allocation2 + $0x1f4] sm:$0xf]
    %v163 = vld [vmem:[#allocation2 + $0x1f8] sm:$0xf]
    %v164 = vld [vmem:[#allocation2 + $0x1fc] sm:$0xf]
    %v165 = vld [vmem:[%s2] sm:$0x1]
    %v167 = vperm.slane %v165, 0
    %170 = vst [vmem:[#allocation1] ss:$9 sm:$0xff] %v36
    %v171 = vld [vmem:[#allocation1] sm:$0xff]
    %v172 = vld [vmem:[#allocation1 + $0x9] sm:$0xff]
    %v173 = vld [vmem:[#allocation1 + $0x12] sm:$0xff]
    %v174 = vld [vmem:[#allocation1 + $0x1b] sm:$0xff]
    %v175 = vld [vmem:[#allocation1 + $0x24] sm:$0xff]
    %v176 = vld [vmem:[#allocation1 + $0x2d] sm:$0xff]
    %v177 = vld [vmem:[#allocation1 + $0x36] sm:$0xff]
    %v178 = vld [vmem:[#allocation1 + $0x3f] sm:$0xff]
    %v315 = vunpack.c.l.b16 %v37
    %v316 = vunpack.c.l.b16 %v38
    %v317 = vunpack.c.l.b16 %v39
    %v318 = vunpack.c.l.b16 %v40
    %v319 = vunpack.c.l.b16 %v41
    %v320 = vunpack.c.l.b16 %v42
    %v321 = vunpack.c.l.b16 %v43
    %v322 = vunpack.c.l.b16 %v44
    %v323 = vunpack.c.l.b16 %v45
    %v324 = vunpack.c.l.b16 %v46
    %v325 = vunpack.c.l.b16 %v47
    %v326 = vunpack.c.l.b16 %v48
    %v327 = vunpack.c.l.b16 %v49
    %v328 = vunpack.c.l.b16 %v50
    %v329 = vunpack.c.l.b16 %v51
    %v330 = vunpack.c.l.b16 %v52
    %v331 = vunpack.c.l.b16 %v53
    %v332 = vunpack.c.l.b16 %v54
    %v333 = vunpack.c.l.b16 %v55
    %v334 = vunpack.c.l.b16 %v56
    %v335 = vunpack.c.l.b16 %v57
    %v336 = vunpack.c.l.b16 %v58
    %v337 = vunpack.c.l.b16 %v59
    %v338 = vunpack.c.l.b16 %v60
    %v339 = vunpack.c.l.b16 %v61
    %v340 = vunpack.c.l.b16 %v62
    %v341 = vunpack.c.l.b16 %v63
    %v342 = vunpack.c.l.b16 %v64
    %v343 = vunpack.c.l.b16 %v65
    %v344 = vunpack.c.l.b16 %v66
    %v345 = vunpack.c.l.b16 %v67
    %v346 = vunpack.c.l.b16 %v68
    %v347 = vunpack.c.l.b16 %v69
    %v348 = vunpack.c.l.b16 %v70
    %v349 = vunpack.c.l.b16 %v71
    %v350 = vunpack.c.l.b16 %v72
    %v351 = vunpack.c.l.b16 %v73
    %v352 = vunpack.c.l.b16 %v74
    %v353 = vunpack.c.l.b16 %v75
    %v354 = vunpack.c.l.b16 %v76
    %v355 = vunpack.c.l.b16 %v77
    %v356 = vunpack.c.l.b16 %v78
    %v357 = vunpack.c.l.b16 %v79
    %v358 = vunpack.c.l.b16 %v80
    %v359 = vunpack.c.l.b16 %v81
    %v360 = vunpack.c.l.b16 %v82
    %v361 = vunpack.c.l.b16 %v83
    %v362 = vunpack.c.l.b16 %v84
    %v363 = vunpack.c.l.b16 %v85
    %v364 = vunpack.c.l.b16 %v86
    %v365 = vunpack.c.l.b16 %v87
    %v366 = vunpack.c.l.b16 %v88
    %v367 = vunpack.c.l.b16 %v89
    %v368 = vunpack.c.l.b16 %v90
    %v369 = vunpack.c.l.b16 %v91
    %v370 = vunpack.c.l.b16 %v92
    %v371 = vunpack.c.l.b16 %v93
    %v372 = vunpack.c.l.b16 %v94
    %v373 = vunpack.c.l.b16 %v95
    %v374 = vunpack.c.l.b16 %v96
    %v375 = vunpack.c.l.b16 %v97
    %v376 = vunpack.c.l.b16 %v98
    %v377 = vunpack.c.l.b16 %v99
    %v378 = vunpack.c.l.b16 %v100
    %v379 = vunpack.c.l.b16 %v101
    %v380 = vunpack.c.l.b16 %v102
    %v381 = vunpack.c.l.b16 %v103
    %v382 = vunpack.c.l.b16 %v104
    %v383 = vunpack.c.l.b16 %v105
    %v384 = vunpack.c.l.b16 %v106
    %v385 = vunpack.c.l.b16 %v107
    %v386 = vunpack.c.l.b16 %v108
    %v387 = vunpack.c.l.b16 %v109
    %v388 = vunpack.c.l.b16 %v110
    %v389 = vunpack.c.l.b16 %v111
    %v390 = vunpack.c.l.b16 %v112
    %v391 = vunpack.c.l.b16 %v113
    %v392 = vunpack.c.l.b16 %v114
    %v393 = vunpack.c.l.b16 %v115
    %v394 = vunpack.c.l.b16 %v116
    %v395 = vunpack.c.l.b16 %v117
    %v396 = vunpack.c.l.b16 %v118
    %v397 = vunpack.c.l.b16 %v119
    %v398 = vunpack.c.l.b16 %v120
    %v399 = vunpack.c.l.b16 %v121
    %v400 = vunpack.c.l.b16 %v122
    %v401 = vunpack.c.l.b16 %v123
    %v402 = vunpack.c.l.b16 %v124
    %v403 = vunpack.c.l.b16 %v125
    %v404 = vunpack.c.l.b16 %v126
    %v405 = vunpack.c.l.b16 %v127
    %v406 = vunpack.c.l.b16 %v128
    %v407 = vunpack.c.l.b16 %v129
    %v408 = vunpack.c.l.b16 %v130
    %v409 = vunpack.c.l.b16 %v131
    %v410 = vunpack.c.l.b16 %v132
    %v411 = vunpack.c.l.b16 %v133
    %v412 = vunpack.c.l.b16 %v134
    %v413 = vunpack.c.l.b16 %v135
    %v414 = vunpack.c.l.b16 %v136
    %v415 = vunpack.c.l.b16 %v137
    %v416 = vunpack.c.l.b16 %v138
    %v417 = vunpack.c.l.b16 %v139
    %v418 = vunpack.c.l.b16 %v140
    %v419 = vunpack.c.l.b16 %v141
    %v420 = vunpack.c.l.b16 %v142
    %v421 = vunpack.c.l.b16 %v143
    %v422 = vunpack.c.l.b16 %v144
    %v423 = vunpack.c.l.b16 %v145
    %v424 = vunpack.c.l.b16 %v146
    %v425 = vunpack.c.l.b16 %v147
    %v426 = vunpack.c.l.b16 %v148
    %v427 = vunpack.c.l.b16 %v149
    %v428 = vunpack.c.l.b16 %v150
    %v429 = vunpack.c.l.b16 %v151
    %v430 = vunpack.c.l.b16 %v152
    %v431 = vunpack.c.l.b16 %v153
    %v432 = vunpack.c.l.b16 %v154
    %v433 = vunpack.c.l.b16 %v155
    %v434 = vunpack.c.l.b16 %v156
    %v435 = vunpack.c.l.b16 %v157
    %v436 = vunpack.c.l.b16 %v158
    %v437 = vunpack.c.l.b16 %v159
    %v438 = vunpack.c.l.b16 %v160
    %v439 = vunpack.c.l.b16 %v161
    %v440 = vunpack.c.l.b16 %v162
    %v441 = vunpack.c.l.b16 %v163
    %v442 = vunpack.c.l.b16 %v164
    %v443 = vpack.c.b16 %v316, %v315
    %v444 = vpack.c.b16 %v318, %v317
    %v445 = vpack.c.b16 %v320, %v319
    %v446 = vpack.c.b16 %v322, %v321
    %v447 = vpack.c.b16 %v324, %v323
    %v448 = vpack.c.b16 %v326, %v325
    %v449 = vpack.c.b16 %v328, %v327
    %v450 = vpack.c.b16 %v330, %v329
    %v451 = vpack.c.b16 %v332, %v331
    %v452 = vpack.c.b16 %v334, %v333
    %v453 = vpack.c.b16 %v336, %v335
    %v454 = vpack.c.b16 %v338, %v337
    %v455 = vpack.c.b16 %v340, %v339
    %v456 = vpack.c.b16 %v342, %v341
    %v457 = vpack.c.b16 %v344, %v343
    %v458 = vpack.c.b16 %v346, %v345
    %v459 = vpack.c.b16 %v348, %v347
    %v460 = vpack.c.b16 %v350, %v349
    %v461 = vpack.c.b16 %v352, %v351
    %v462 = vpack.c.b16 %v354, %v353
    %v463 = vpack.c.b16 %v356, %v355
    %v464 = vpack.c.b16 %v358, %v357
    %v465 = vpack.c.b16 %v360, %v359
    %v466 = vpack.c.b16 %v362, %v361
    %v467 = vpack.c.b16 %v364, %v363
    %v468 = vpack.c.b16 %v366, %v365
    %v469 = vpack.c.b16 %v368, %v367
    %v470 = vpack.c.b16 %v370, %v369
    %v471 = vpack.c.b16 %v372, %v371
    %v472 = vpack.c.b16 %v374, %v373
    %v473 = vpack.c.b16 %v376, %v375
    %v474 = vpack.c.b16 %v378, %v377
    %v475 = vpack.c.b16 %v380, %v379
    %v476 = vpack.c.b16 %v382, %v381
    %v477 = vpack.c.b16 %v384, %v383
    %v478 = vpack.c.b16 %v386, %v385
    %v479 = vpack.c.b16 %v388, %v387
    %v480 = vpack.c.b16 %v390, %v389
    %v481 = vpack.c.b16 %v392, %v391
    %v482 = vpack.c.b16 %v394, %v393
    %v483 = vpack.c.b16 %v396, %v395
    %v484 = vpack.c.b16 %v398, %v397
    %v485 = vpack.c.b16 %v400, %v399
    %v486 = vpack.c.b16 %v402, %v401
    %v487 = vpack.c.b16 %v404, %v403
    %v488 = vpack.c.b16 %v406, %v405
    %v489 = vpack.c.b16 %v408, %v407
    %v490 = vpack.c.b16 %v410, %v409
    %v491 = vpack.c.b16 %v412, %v411
    %v492 = vpack.c.b16 %v414, %v413
    %v493 = vpack.c.b16 %v416, %v415
    %v494 = vpack.c.b16 %v418, %v417
    %v495 = vpack.c.b16 %v420, %v419
    %v496 = vpack.c.b16 %v422, %v421
    %v497 = vpack.c.b16 %v424, %v423
    %v498 = vpack.c.b16 %v426, %v425
    %v499 = vpack.c.b16 %v428, %v427
    %v500 = vpack.c.b16 %v430, %v429
    %v501 = vpack.c.b16 %v432, %v431
    %v502 = vpack.c.b16 %v434, %v433
    %v503 = vpack.c.b16 %v436, %v435
    %v504 = vpack.c.b16 %v438, %v437
    %v505 = vpack.c.b16 %v440, %v439
    %v506 = vpack.c.b16 %v442, %v441
    %571 = vmatpush.bf16.msra.mxu0 %v450
    %572 = vmatpush.bf16.msra.mxu0 %v449
    %573 = vmatpush.bf16.msra.mxu0 %v448
    %574 = vmatpush.bf16.msra.mxu0 %v447
    %575 = vmatpush.bf16.msra.mxu0 %v446
    %576 = vmatpush.bf16.msra.mxu0 %v445
    %577 = vmatpush.bf16.msra.mxu0 %v444
    %578 = vmatpush.bf16.msra.mxu0 %v443
    %579 = vmatmul.bf16.gmra.mxu0 %v171
    %v580 = vpop.f32.mrf.mxu0
    %v581 = vadd.f32 %v167, %v580
    %v582 = vpop.f32.mrf.mxu0
    %583 = vdwg.mxu0
    %584 = vmatpush.bf16.msra.mxu0 %v458
    %585 = vmatpush.bf16.msra.mxu0 %v457
    %586 = vmatpush.bf16.msra.mxu0 %v456
    %587 = vmatpush.bf16.msra.mxu0 %v455
    %588 = vmatpush.bf16.msra.mxu0 %v454
    %589 = vmatpush.bf16.msra.mxu0 %v453
    %590 = vmatpush.bf16.msra.mxu0 %v452
    %591 = vmatpush.bf16.msra.mxu0 %v451
    %592 = vmatmul.bf16.gmra.mxu0 %v172
    %v593 = vpop.f32.mrf.mxu0
    %v594 = vadd.f32 %v581, %v593
    %v595 = vpop.f32.mrf.mxu0
    %596 = vdwg.mxu0
    %597 = vmatpush.bf16.msra.mxu0 %v466
    %598 = vmatpush.bf16.msra.mxu0 %v465
    %599 = vmatpush.bf16.msra.mxu0 %v464
    %600 = vmatpush.bf16.msra.mxu0 %v463
    %601 = vmatpush.bf16.msra.mxu0 %v462
    %602 = vmatpush.bf16.msra.mxu0 %v461
    %603 = vmatpush.bf16.msra.mxu0 %v460
    %604 = vmatpush.bf16.msra.mxu0 %v459
    %605 = vmatmul.bf16.gmra.mxu0 %v173
    %v606 = vpop.f32.mrf.mxu0
    %v607 = vadd.f32 %v594, %v606
    %v608 = vpop.f32.mrf.mxu0
    %609 = vdwg.mxu0
    %610 = vmatpush.bf16.msra.mxu0 %v474
    %611 = vmatpush.bf16.msra.mxu0 %v473
    %612 = vmatpush.bf16.msra.mxu0 %v472
    %613 = vmatpush.bf16.msra.mxu0 %v471
    %614 = vmatpush.bf16.msra.mxu0 %v470
    %615 = vmatpush.bf16.msra.mxu0 %v469
    %616 = vmatpush.bf16.msra.mxu0 %v468
    %617 = vmatpush.bf16.msra.mxu0 %v467
    %618 = vmatmul.bf16.gmra.mxu0 %v174
    %v619 = vpop.f32.mrf.mxu0
    %v620 = vadd.f32 %v607, %v619
    %v621 = vpop.f32.mrf.mxu0
    %622 = vdwg.mxu0
    %623 = vmatpush.bf16.msra.mxu0 %v482
    %624 = vmatpush.bf16.msra.mxu0 %v481
    %625 = vmatpush.bf16.msra.mxu0 %v480
    %626 = vmatpush.bf16.msra.mxu0 %v479
    %627 = vmatpush.bf16.msra.mxu0 %v478
    %628 = vmatpush.bf16.msra.mxu0 %v477
    %629 = vmatpush.bf16.msra.mxu0 %v476
    %630 = vmatpush.bf16.msra.mxu0 %v475
    %631 = vmatmul.bf16.gmra.mxu0 %v175
    %v632 = vpop.f32.mrf.mxu0
    %v633 = vadd.f32 %v620, %v632
    %v634 = vpop.f32.mrf.mxu0
    %635 = vdwg.mxu0
    %636 = vmatpush.bf16.msra.mxu0 %v490
    %637 = vmatpush.bf16.msra.mxu0 %v489
    %638 = vmatpush.bf16.msra.mxu0 %v488
    %639 = vmatpush.bf16.msra.mxu0 %v487
    %640 = vmatpush.bf16.msra.mxu0 %v486
    %641 = vmatpush.bf16.msra.mxu0 %v485
    %642 = vmatpush.bf16.msra.mxu0 %v484
    %643 = vmatpush.bf16.msra.mxu0 %v483
    %644 = vmatmul.bf16.gmra.mxu0 %v176
    %v645 = vpop.f32.mrf.mxu0
    %v646 = vadd.f32 %v633, %v645
    %v647 = vpop.f32.mrf.mxu0
    %648 = vdwg.mxu0
    %649 = vmatpush.bf16.msra.mxu0 %v498
    %650 = vmatpush.bf16.msra.mxu0 %v497
    %651 = vmatpush.bf16.msra.mxu0 %v496
    %652 = vmatpush.bf16.msra.mxu0 %v495
    %653 = vmatpush.bf16.msra.mxu0 %v494
    %654 = vmatpush.bf16.msra.mxu0 %v493
    %655 = vmatpush.bf16.msra.mxu0 %v492
    %656 = vmatpush.bf16.msra.mxu0 %v491
    %657 = vmatmul.bf16.gmra.mxu0 %v177
    %v658 = vpop.f32.mrf.mxu0
    %v659 = vadd.f32 %v646, %v658
    %v660 = vpop.f32.mrf.mxu0
    %661 = vdwg.mxu0
    %662 = vmatpush.bf16.msra.mxu0 %v506
    %663 = vmatpush.bf16.msra.mxu0 %v505
    %664 = vmatpush.bf16.msra.mxu0 %v504
    %665 = vmatpush.bf16.msra.mxu0 %v503
    %666 = vmatpush.bf16.msra.mxu0 %v502
    %667 = vmatpush.bf16.msra.mxu0 %v501
    %668 = vmatpush.bf16.msra.mxu0 %v500
    %669 = vmatpush.bf16.msra.mxu0 %v499
    %670 = vmatmul.bf16.gmra.mxu0 %v178
    %v671 = vpop.f32.mrf.mxu0
    %v672 = vadd.f32 %v659, %v671
    %v673 = vpop.f32.mrf.mxu0
    %674 = vdwg.mxu0
    %v675 = vmul.f32 %v672, 1.442695
    %v676 = vpow.pop %v675
    %v677 = vld [vmem:[%s3] sm:$0xff]
    %v678 = vld [vmem:[%s3 + $0x8] sm:$0xff]
    %v679 = vld [vmem:[%s3 + $0x10] sm:$0xff]
    %v680 = vld [vmem:[%s3 + $0x18] sm:$0xff]
    %v681 = vld [vmem:[%s3 + $0x20] sm:$0xff]
    %v682 = vld [vmem:[%s3 + $0x28] sm:$0xff]
    %v683 = vld [vmem:[%s3 + $0x30] sm:$0xff]
    %v684 = vld [vmem:[%s3 + $0x38] sm:$0xff]
    %v685 = vld [vmem:[%s3 + $0x40] sm:$0xff]
    %v686 = vld [vmem:[%s3 + $0x48] sm:$0xff]
    %v687 = vld [vmem:[%s3 + $0x50] sm:$0xff]
    %v688 = vld [vmem:[%s3 + $0x58] sm:$0xff]
    %v689 = vld [vmem:[%s3 + $0x60] sm:$0xff]
    %v690 = vld [vmem:[%s3 + $0x68] sm:$0xff]
    %v691 = vld [vmem:[%s3 + $0x70] sm:$0xff]
    %v692 = vld [vmem:[%s3 + $0x78] sm:$0xff]
    %693 = vmatpush.msra.mxu0 %v692
    %694 = vmatpush.msra.mxu0 %v691
    %695 = vmatpush.msra.mxu0 %v690
    %696 = vmatpush.msra.mxu0 %v689
    %697 = vmatpush.msra.mxu0 %v688
    %698 = vmatpush.msra.mxu0 %v687
    %699 = vmatpush.msra.mxu0 %v686
    %700 = vmatpush.msra.mxu0 %v685
    %701 = vmatpush.msra.mxu0 %v684
    %702 = vmatpush.msra.mxu0 %v683
    %703 = vmatpush.msra.mxu0 %v682
    %704 = vmatpush.msra.mxu0 %v681
    %705 = vmatpush.msra.mxu0 %v680
    %706 = vmatpush.msra.mxu0 %v679
    %707 = vmatpush.msra.mxu0 %v678
    %708 = vmatpush.msra.mxu0 %v677
    %709 = vmatmul.f32.gmra.mxu0 %v676
    %v710 = vpop.f32.mrf.mxu0
    %v711 = vadd.f32 0.0, %v710
    %712 = vdwg.mxu0
    %v713 = vrcp.pop %v711
    %v714 = vmul.f32 %v711, %v713
    %v715 = vsub.f32 2.0, %v714
    %v716 = vmul.f32 %v713, %v715
    %v717 = vmul.f32 %v676, %v716
    %718 = vst [vmem:[%s4] sm:$0x3] %v717
    %719 = vst [vmem:[%s5] sm:$0x3] %v676
    %720 = vst [vmem:[%s6] sm:$0x3] %v711
    // Predicated region
    $region22: #{prior_ensemble_forward.1} parent=1 // pred_check
      _
    $region23: #{prior_ensemble_forward.1} parent=1 // pred_check_branch
      %722 = sbr.rel (0) target = $region25
    $region24: #{prior_ensemble_forward.1} parent=1 // pred_region
      _
    $region25: #{prior_ensemble_forward.1} parent=1 // pred_fallthru
      _
    // Predicated region
    $region26: #{prior_ensemble_forward.1} parent=1 // pred_check
      _
    $region27: #{prior_ensemble_forward.1} parent=1 // pred_check_branch
      %724 = sbr.rel (0) target = $region29
    $region28: #{prior_ensemble_forward.1} parent=1 // pred_region
      _
    $region29: #{prior_ensemble_forward.1} parent=1 // pred_fallthru
      _
    // Predicated region
    $region30: #{prior_ensemble_forward.1} parent=1 // pred_check
      _
    $region31: #{prior_ensemble_forward.1} parent=1 // pred_check_branch
      %726 = sbr.rel (0) target = $region33
    $region32: #{prior_ensemble_forward.1} parent=1 // pred_region
      _
    $region33: #{prior_ensemble_forward.1} parent=1 // pred_fallthru
      _
    // Predicated region
    $region34: #{prior_ensemble_forward.1} parent=1 // pred_check
      _
    $region35: #{prior_ensemble_forward.1} parent=1 // pred_check_branch
      %728 = sbr.rel (0) target = $region37
    $region36: #{prior_ensemble_forward.1} parent=1 // pred_region
      _
    $region37: #{prior_ensemble_forward.1} parent=1 // pred_fallthru
      _
    // Predicated region
    $region38: #{prior_ensemble_forward.1} parent=1 // pred_check
      _
    $region39: #{prior_ensemble_forward.1} parent=1 // pred_check_branch
      %730 = sbr.rel (0) target = $region41
    $region40: #{prior_ensemble_forward.1} parent=1 // pred_region
      _
    $region41: #{prior_ensemble_forward.1} parent=1 // pred_fallthru
      _
    // Predicated region
    $region42: #{prior_ensemble_forward.1} parent=1 // pred_check
      _
    $region43: #{prior_ensemble_forward.1} parent=1 // pred_check_branch
      %732 = sbr.rel (0) target = $region45
    $region44: #{prior_ensemble_forward.1} parent=1 // pred_region
      _
    $region45: #{prior_ensemble_forward.1} parent=1 // pred_fallthru
      _
    %733 = vsyncpa [#allocation3], 1

</llo_original>
